<compile_context>
chip_gen: v7x
topology: tpu7x:2x2x1
jax: 0.10.0
libtpu: 0.0.40
codegen_flags: <defaults>
</compile_context>

<pallas_src>
import functools

import jax
import jax.numpy as jnp
from jax.experimental import pallas as pl
from jax.experimental.pallas import tpu as pltpu


def _round_up(x, m):
    return ((x + m - 1) // m) * m


def _cdiv(a, b):
    return (a + b - 1) // b


# ---------------------------------------------------------------------------
# Fused single-read path: one grid step per batch keeps the whole (C, S) band
# resident in VMEM -> read x once, pool, FC, scale, write once (2x|x| HBM).
# ---------------------------------------------------------------------------
def _fused_se_kernel(inv_spatial, x_ref, w1_ref, b1_ref, w2_ref, b2_ref,
                     o_ref):
    x = x_ref[0]                                                # (C, S)
    mean = jnp.sum(x, axis=-1, keepdims=True,
                   dtype=jnp.float32) * inv_spatial             # (C, 1) f32
    h = jnp.dot(w1_ref[...], mean,
                preferred_element_type=jnp.float32) + b1_ref[...]   # (Cr, 1)
    h = jnp.maximum(h, 0.0)
    s = jnp.dot(w2_ref[...], h,
                preferred_element_type=jnp.float32) + b2_ref[...]   # (C, 1)
    s = jax.nn.sigmoid(s)
    # Multiply in f32, cast the product (see header note).
    o_ref[0] = (x * s).astype(o_ref.dtype)


# ---------------------------------------------------------------------------
# Streaming pass 1: per-(batch*channel) spatial sums, S tiled ("arbitrary").
# ---------------------------------------------------------------------------
def _pool_sum_kernel(total_s, s_tile, needs_mask, x_ref, sum_ref):
    s = pl.program_id(1)

    @pl.when(s == 0)
    def _init():
        sum_ref[...] = jnp.zeros_like(sum_ref)

    def _full_sum():
        sum_ref[...] += jnp.sum(x_ref[...], axis=-1, keepdims=True,
                                dtype=jnp.float32)

    if needs_mask:
        n_s = pl.num_programs(1)

        @pl.when(s < n_s - 1)
        def _full():
            _full_sum()

        @pl.when(s == n_s - 1)
        def _ragged():
            # Last spatial tile is partial: mask lanes beyond the true S so
            # stale VMEM contents never reach the sum.
            lane = jax.lax.broadcasted_iota(jnp.int32, x_ref.shape, 1)
            valid = (s * s_tile + lane) < total_s
            xs = jnp.where(valid, x_ref[...].astype(jnp.float32), 0.0)
            sum_ref[...] += jnp.sum(xs, axis=-1, keepdims=True)
    else:
        _full_sum()


# ---------------------------------------------------------------------------
# Streaming pass 3: re-stream x and scale each (batch, channel) row.
# Partial edge output blocks are write-masked by Pallas -> no mask needed.
# ---------------------------------------------------------------------------
def _scale_kernel(x_ref, scale_ref, o_ref):
    o_ref[...] = (x_ref[...] * scale_ref[...]).astype(o_ref.dtype)


def channel_se_layer(x, w1, b1, w2, b2, *,
                     target_rows=512,
                     target_tile_bytes=8 * 1024 * 1024,
                     fast_path_band_bytes=8 * 1024 * 1024,
                     vmem_limit_bytes=48 * 1024 * 1024,
                     force_streaming=False):
    """x: (N, C, D, H, W); w1: (Cr, C); b1: (Cr,); w2: (C, Cr); b2: (C,)."""
    N, C, D, H, W = x.shape
    S = D * H * W
    Cr = w1.shape[0]
    R = N * C
    itemsize = x.dtype.itemsize
    inv_spatial = 1.0 / S

    # ---------------- fused single-read fast path ----------------
    if not force_streaming and C * S * itemsize <= fast_path_band_bytes:
        x3 = x.reshape(N, C, S)                  # contiguous -> free reshape
        out = pl.pallas_call(
            functools.partial(_fused_se_kernel, inv_spatial),
            out_shape=jax.ShapeDtypeStruct((N, C, S), x.dtype),
            grid=(N,),
            in_specs=[
                pl.BlockSpec((1, C, S), lambda n: (n, 0, 0)),
                pl.BlockSpec((Cr, C), lambda n: (0, 0)),
                pl.BlockSpec((Cr, 1), lambda n: (0, 0)),
                pl.BlockSpec((C, Cr), lambda n: (0, 0)),
                pl.BlockSpec((C, 1), lambda n: (0, 0)),
            ],
            out_specs=pl.BlockSpec((1, C, S), lambda n: (n, 0, 0)),
            compiler_params=pltpu.CompilerParams(
                dimension_semantics=("parallel",),
                vmem_limit_bytes=vmem_limit_bytes),
            cost_estimate=pl.CostEstimate(
                flops=2 * N * C * S + 4 * N * C * Cr,
                transcendentals=2 * N * C,
                bytes_accessed=2 * N * C * S * itemsize + 2 * C * Cr * 4),
        )(x3, w1, b1.reshape(Cr, 1), w2, b2.reshape(C, 1))
        return out.reshape(N, C, D, H, W)

    # ---------------- streaming two-pass fallback ----------------
    xf = x.reshape(R, S)                         # contiguous -> free reshape

    # dtype-aware sublane granule: 8 for 4-byte, 16 for bf16, 32 for 1-byte.
    sublane = max(8, 32 // itemsize)

    # Balanced row tiles (waste bounded by one sublane granule, not a tile).
    n_r = max(1, _cdiv(R, target_rows))
    r_tile = min(_round_up(_cdiv(R, n_r), sublane), _round_up(R, sublane))
    if _cdiv(R, r_tile) == 1 and R > sublane:
        # Ensure >= 2 "parallel" row blocks so both v7x TensorCores stream.
        r_tile = _round_up(_cdiv(R, 2), sublane)
    n_r = _cdiv(R, r_tile)

    # Balanced lane tiles targeting ~target_tile_bytes per streamed tile.
    lane_target = max(128, target_tile_bytes // (r_tile * itemsize))
    n_s = max(1, _cdiv(S, lane_target))
    s_tile = min(_round_up(_cdiv(S, n_s), 128), _round_up(S, 128))
    n_s = _cdiv(S, s_tile)
    needs_mask = (S % s_tile) != 0

    # ---- pass 1: spatial sums (ragged edges masked in-kernel, no pad) ----
    sums = pl.pallas_call(
        functools.partial(_pool_sum_kernel, S, s_tile, needs_mask),
        out_shape=jax.ShapeDtypeStruct((R, 1), jnp.float32),
        grid=(n_r, n_s),
        in_specs=[pl.BlockSpec((r_tile, s_tile), lambda r, s: (r, s))],
        out_specs=pl.BlockSpec((r_tile, 1), lambda r, s: (r, 0)),
        compiler_params=pltpu.CompilerParams(
            dimension_semantics=("parallel", "arbitrary"),
            vmem_limit_bytes=vmem_limit_bytes),
        cost_estimate=pl.CostEstimate(
            flops=R * S, transcendentals=0,
            bytes_accessed=R * S * itemsize + R * 4),
    )(xf)

    # ---- pass 2: tiny FC chain on the (N, C) means, plain jnp ----
    # Operands are far below one MXU tile; a dedicated pallas_call would be
    # pure launch overhead plus an HBM round-trip for pooled/scale.
    means = sums.reshape(N, C) * inv_spatial
    h = jnp.maximum(means @ w1.T + b1, 0.0)               # (N, Cr)
    scale = jax.nn.sigmoid(h @ w2.T + b2)                 # (N, C) f32
    scale_rows = scale.reshape(R, 1)

    # ---- pass 3: re-stream x and scale per (batch, channel) row ----
    out = pl.pallas_call(
        _scale_kernel,
        out_shape=jax.ShapeDtypeStruct((R, S), x.dtype),
        grid=(n_r, n_s),
        in_specs=[
            pl.BlockSpec((r_tile, s_tile), lambda r, s: (r, s)),
            pl.BlockSpec((r_tile, 1), lambda r, s: (r, 0)),
        ],
        out_specs=pl.BlockSpec((r_tile, s_tile), lambda r, s: (r, s)),
        compiler_params=pltpu.CompilerParams(
            dimension_semantics=("parallel", "parallel"),
            vmem_limit_bytes=vmem_limit_bytes),
        cost_estimate=pl.CostEstimate(
            flops=R * S, transcendentals=0,
            bytes_accessed=2 * R * S * itemsize + R * 4),
    )(xf, scale_rows)

    return out.reshape(N, C, D, H, W)


def channel_se_reference(x, w1, b1, w2, b2):
    """Pure-JAX reference matching the PyTorch forward."""
    pooled = jnp.mean(x, axis=(2, 3, 4))                  # (N, C)
    h = jnp.maximum(pooled @ w1.T + b1, 0.0)              # (N, Cr)
    s = jax.nn.sigmoid(h @ w2.T + b2)                     # (N, C)
    return x * s[:, :, None, None, None]


if __name__ == "__main__":
    key = jax.random.PRNGKey(0)
    kx, k1, k2, k3, k4, kx2 = jax.random.split(key, 6)

    # Weights shared by both tests (C=4, reduction_ratio=2 -> Cr=2).
    C = 4
    Cr = C // 2
    w1 = jax.random.normal(k1, (Cr, C), dtype=jnp.float32) * 0.5
    b1 = jax.random.normal(k2, (Cr,), dtype=jnp.float32) * 0.1
    w2 = jax.random.normal(k3, (C, Cr), dtype=jnp.float32) * 0.5
    b2 = jax.random.normal(k4, (C,), dtype=jnp.float32) * 0.1

    # Test 1: even shapes -> fused single-read path + streaming (full tiles).
    N, D, H, W = 2, 8, 8, 8
    x = jax.random.normal(kx, (N, C, D, H, W), dtype=jnp.float32)
    ref = channel_se_reference(x, w1, b1, w2, b2)

    out_fast = jax.block_until_ready(channel_se_layer(x, w1, b1, w2, b2))
    assert out_fast.shape == x.shape
    assert jnp.allclose(out_fast, ref, atol=1e-5, rtol=1e-5)

    out_stream = jax.block_until_ready(
        channel_se_layer(x, w1, b1, w2, b2, force_streaming=True))
    assert jnp.allclose(out_stream, ref, atol=1e-5, rtol=1e-5)

    # Test 2: ragged shapes -> exercises the in-kernel masking of the last
    # spatial tile and ragged row blocks (no jnp.pad anywhere).
    N2, D2, H2, W2 = 1, 5, 7, 9
    x2 = jax.random.normal(kx2, (N2, C, D2, H2, W2), dtype=jnp.float32)
    ref2 = channel_se_reference(x2, w1, b1, w2, b2)

    out2_fast = jax.block_until_ready(channel_se_layer(x2, w1, b1, w2, b2))
    assert jnp.allclose(out2_fast, ref2, atol=1e-5, rtol=1e-5)

    out2_stream = jax.block_until_ready(
        channel_se_layer(x2, w1, b1, w2, b2, force_streaming=True,
                         target_tile_bytes=8 * 128 * 4))
    assert jnp.allclose(out2_stream, ref2, atol=1e-5, rtol=1e-5)

    print("KERNEL_OK")
</pallas_src>

<mosaic_0001>
module attributes {stable_mosaic.version = 11 : i64} {
  func.func @_fused_se_kernel(%arg0: i32, %arg1: memref<1x4x512xf32, #tpu.memory_space<vmem>>, %arg2: memref<2x4xf32, #tpu.memory_space<vmem>>, %arg3: memref<2x1xf32, #tpu.memory_space<vmem>>, %arg4: memref<4x2xf32, #tpu.memory_space<vmem>>, %arg5: memref<4x1xf32, #tpu.memory_space<vmem>>, %arg6: memref<1x4x512xf32, #tpu.memory_space<vmem>>) attributes {dimension_semantics = [#tpu.dimension_semantics<parallel>], iteration_bounds = array<i64: 2>, scalar_prefetch = 0 : i64, scratch_operands = 0 : i64, tpu.core_type = #tpu.core_type<tc>, window_params = [{transform_indices = @transform_0, window_bounds = array<i64: 1, 4, 512>}, {pipeline_mode = #tpu.pipeline_mode<synchronous>, transform_indices = @transform_1, window_bounds = array<i64: 2, 4>}, {pipeline_mode = #tpu.pipeline_mode<synchronous>, transform_indices = @transform_2, window_bounds = array<i64: 2, 1>}, {pipeline_mode = #tpu.pipeline_mode<synchronous>, transform_indices = @transform_3, window_bounds = array<i64: 4, 2>}, {pipeline_mode = #tpu.pipeline_mode<synchronous>, transform_indices = @transform_4, window_bounds = array<i64: 4, 1>}, {transform_indices = @transform_5, window_bounds = array<i64: 1, 4, 512>}]} {
    %c0 = arith.constant 0 : index
    %c0_0 = arith.constant 0 : index
    %c0_1 = arith.constant 0 : index
    %0 = vector.load %arg1[%c0, %c0_0, %c0_1] : memref<1x4x512xf32, #tpu.memory_space<vmem>>, vector<1x4x512xf32>
    %1 = vector.shape_cast %0 : vector<1x4x512xf32> to vector<4x512xf32>
    %cst = arith.constant dense<0.000000e+00> : vector<4xf32>
    %2 = vector.multi_reduction <add>, %1, %cst [1] : vector<4x512xf32> to vector<4xf32>
    %3 = vector.shape_cast %2 : vector<4xf32> to vector<4x1xf32>
    %cst_2 = arith.constant 0.001953125 : f32
    %4 = vector.broadcast %cst_2 : f32 to vector<4x1xf32>
    %5 = arith.mulf %3, %4 : vector<4x1xf32>
    %c0_3 = arith.constant 0 : index
    %c0_4 = arith.constant 0 : index
    %6 = vector.load %arg2[%c0_3, %c0_4] : memref<2x4xf32, #tpu.memory_space<vmem>>, vector<2x4xf32>
    %cst_5 = arith.constant dense<0.000000e+00> : vector<2x1xf32>
    %7 = tpu.matmul %6, %5, %cst_5 {dimension_numbers = #tpu.dot_dimension_numbers<[1], [0], [0], [1], [0, 0, 1, 1], [], []>} : vector<2x4xf32>, vector<4x1xf32>, vector<2x1xf32> -> vector<2x1xf32>
    %c0_6 = arith.constant 0 : index
    %c0_7 = arith.constant 0 : index
    %8 = vector.load %arg3[%c0_6, %c0_7] : memref<2x1xf32, #tpu.memory_space<vmem>>, vector<2x1xf32>
    %9 = arith.addf %7, %8 : vector<2x1xf32>
    %cst_8 = arith.constant 0.000000e+00 : f32
    %10 = vector.broadcast %cst_8 : f32 to vector<2x1xf32>
    %11 = arith.maximumf %9, %10 : vector<2x1xf32>
    %c0_9 = arith.constant 0 : index
    %c0_10 = arith.constant 0 : index
    %12 = vector.load %arg4[%c0_9, %c0_10] : memref<4x2xf32, #tpu.memory_space<vmem>>, vector<4x2xf32>
    %cst_11 = arith.constant dense<0.000000e+00> : vector<4x1xf32>
    %13 = tpu.matmul %12, %11, %cst_11 {dimension_numbers = #tpu.dot_dimension_numbers<[1], [0], [0], [1], [0, 0, 1, 1], [], []>} : vector<4x2xf32>, vector<2x1xf32>, vector<4x1xf32> -> vector<4x1xf32>
    %c0_12 = arith.constant 0 : index
    %c0_13 = arith.constant 0 : index
    %14 = vector.load %arg5[%c0_12, %c0_13] : memref<4x1xf32, #tpu.memory_space<vmem>>, vector<4x1xf32>
    %15 = arith.addf %13, %14 : vector<4x1xf32>
    %16 = arith.negf %15 : vector<4x1xf32>
    %17 = math.exp %16 : vector<4x1xf32>
    %cst_14 = arith.constant 1.000000e+00 : f32
    %18 = vector.broadcast %cst_14 : f32 to vector<4x1xf32>
    %19 = arith.addf %18, %17 : vector<4x1xf32>
    %20 = arith.divf %18, %19 : vector<4x1xf32>
    %21 = vector.broadcast %20 : vector<4x1xf32> to vector<4x512xf32>
    %22 = arith.mulf %1, %21 : vector<4x512xf32>
    %c0_15 = arith.constant 0 : index
    %c0_16 = arith.constant 0 : index
    %c0_17 = arith.constant 0 : index
    %23 = vector.load %arg6[%c0_15, %c0_16, %c0_17] : memref<1x4x512xf32, #tpu.memory_space<vmem>>, vector<1x4x512xf32>
    %24 = vector.shape_cast %23 : vector<1x4x512xf32> to vector<4x512xf32>
    %25 = vector.shape_cast %22 : vector<4x512xf32> to vector<1x4x512xf32>
    tpu.vector_store %arg6[%c0_15, %c0_16, %c0_17], %25 {strides = array<i32>} : memref<1x4x512xf32, #tpu.memory_space<vmem>>, vector<1x4x512xf32>,
    return
  }
  func.func @transform_0(%arg0: i32) -> (i32, i32, i32) {
    %c0_i32 = arith.constant 0 : i32
    %c0_i32_0 = arith.constant 0 : i32
    %c0_i32_1 = arith.constant 0 : i32
    return %arg0, %c0_i32, %c0_i32_0 : i32, i32, i32
  }
  func.func @transform_1(%arg0: i32) -> (i32, i32) {
    %c0_i32 = arith.constant 0 : i32
    %c0_i32_0 = arith.constant 0 : i32
    %c0_i32_1 = arith.constant 0 : i32
    return %c0_i32, %c0_i32_0 : i32, i32
  }
  func.func @transform_2(%arg0: i32) -> (i32, i32) {
    %c0_i32 = arith.constant 0 : i32
    %c0_i32_0 = arith.constant 0 : i32
    %c0_i32_1 = arith.constant 0 : i32
    return %c0_i32, %c0_i32_0 : i32, i32
  }
  func.func @transform_3(%arg0: i32) -> (i32, i32) {
    %c0_i32 = arith.constant 0 : i32
    %c0_i32_0 = arith.constant 0 : i32
    %c0_i32_1 = arith.constant 0 : i32
    return %c0_i32, %c0_i32_0 : i32, i32
  }
  func.func @transform_4(%arg0: i32) -> (i32, i32) {
    %c0_i32 = arith.constant 0 : i32
    %c0_i32_0 = arith.constant 0 : i32
    %c0_i32_1 = arith.constant 0 : i32
    return %c0_i32, %c0_i32_0 : i32, i32
  }
  func.func @transform_5(%arg0: i32) -> (i32, i32, i32) {
    %c0_i32 = arith.constant 0 : i32
    %c0_i32_0 = arith.constant 0 : i32
    %c0_i32_1 = arith.constant 0 : i32
    return %arg0, %c0_i32, %c0_i32_0 : i32, i32, i32
  }
}

</mosaic_0001>

<llo_original>
// kernel: tpu_custom_call.1
$region0: #{tpu_custom_call.1}
  #allocation0 [shape = 'u32[]', space=smem, size = 0x4, offset = 0x4, fixed_abs, tag = 'smem constant byte address 0x4 - core index']
  #allocation1 [shape = 'u32[144,128]{1,0:T(1,128)}', space=vmem, size = 0x12000, scoped, tag = 'internal scratch']
  %s0 = inlined_call_operand.hbm [shape: f32[2,4,512], index: 0, kind: input, shape index: {}]
  %s1 = inlined_call_operand.vmem [shape: f32[2,4], index: 1, kind: input, shape index: {}]
  %s2 = inlined_call_operand.vmem [shape: f32[2,1], index: 2, kind: input, shape index: {}]
  %s3 = inlined_call_operand.vmem [shape: f32[4,2], index: 3, kind: input, shape index: {}]
  %s4 = inlined_call_operand.vmem [shape: f32[4,1], index: 4, kind: input, shape index: {}]
  %s5 = inlined_call_operand.hbm [shape: f32[2,4,512], index: 5, kind: output, shape index: {}]
  %s6 = sld [smem:[#allocation0]]
  $region57: #{tpu_custom_call.1} parent=0
    _
  %s8 = ssub.s32 1, %s6
  %s9 = scalar_select 0, %s8, %s6
  $region1: #{tpu_custom_call.1} parent=0
    #allocation2 [shape = 'u8[16384]{0}', space=vmem, size = 0x4000, scoped, tag = 'input window, operand 0']
    #allocation3 [shape = 's32[2]{0}', space=sflag, size = 0x8, scoped, tag = 'scoped memory for tpu_custom_call.1']
    #allocation4 [shape = 's32[2]{0}', space=sflag, size = 0x8, scoped, tag = 'scoped memory for tpu_custom_call.1']
    #allocation5 [shape = 'u8[16384]{0}', space=vmem, size = 0x4000, scoped, tag = 'output window, operand 0']
    %10 = vsyncpa [#allocation3], 0
    %s11 = scalar_lea.sflag [#allocation3], 1
    %12 = vsyncpa %s11, 0
    %13 = vsyncpa [#allocation4], 0
    %s14 = scalar_lea.sflag [#allocation4], 1
    %15 = vsyncpa %s14, 0
    loop: start=0, step=1, limit=4
    $region2: #{tpu_custom_call.1} parent=1 // loop_pre_header
      _
    $region3: #{tpu_custom_call.1} parent=1 // loop_header
      %s17 = sphi 0, %s21
      %p18 = scmp.ge.s32.totalorder %s17, 4
      %s27 = sphi 0, %s29
      %s30 = sphi 0, %s27
      %s31 = sphi 0, %s30
      %s47 = sphi 0, %s31
      %s51 = sphi 0, %s51
      %s53 = sphi 0, %s51
      %s54 = sphi 0, %s53
      %s68 = sphi 0, %s54
      %s72 = sphi 0, %s72
      %s74 = sphi 0, %s72
      %s75 = sphi 0, %s74
      %s89 = sphi 0, %s75
      %s93 = sphi 0, %s93
      %s95 = sphi 0, %s93
      %s96 = sphi 0, %s95
      %s110 = sphi 0, %s96
      %s114 = sphi 0, %s114
      %s116 = sphi 0, %s114
      %s117 = sphi 0, %s116
      %s131 = sphi 0, %s117
      %s137 = sphi 0, %s139
      %s140 = sphi 0, %s137
      %s141 = sphi 0, %s140
      %s157 = sphi 0, %s141
    $region4: #{tpu_custom_call.1} parent=1 // loop_header_branch
      %20 = sbr.rel (%p18) target = $region8
    $region5: #{tpu_custom_call.1} parent=1 // loop_body
      %s22 = ssub.s32 %s17, 1
      %s23 = ssub.s32 %s17, 2
      %s24 = sadd.s32 %s17, 1
      %s25 = ssub.s32 %s17, %s24
      %p26 = scmp.eq.s32.totalorder %s25, 0
      %s28 = sadd.s32 %s27, 1
      %s29 = scalar_select %p26, %s27, %s28
      %p32 = pneg %p26
      %p33 = scmp.eq.s32.totalorder %s17, 1
      %p34 = por %p32, %p33
      %p35 = scmp.ne.s32.totalorder %s27, %s30
      %p36 = scmp.eq.s32.totalorder %s17, 0
      %p37 = por %p35, %p36
      %p38 = scmp.ne.s32.totalorder %s27, %s30
      %p39 = scmp.eq.s32.totalorder %s22, 1
      %p40 = por %p38, %p39
      %p41 = scmp.ne.s32.totalorder %s30, %s31
      %p42 = scmp.eq.s32.totalorder %s22, 0
      %p43 = por %p41, %p42
      %p44 = scmp.ne.s32.totalorder %s30, %s31
      %p45 = scmp.eq.s32.totalorder %s23, 1
      %p46 = por %p44, %p45
      %p48 = scmp.ne.s32.totalorder %s31, %s47
      %p49 = scmp.eq.s32.totalorder %s23, 0
      %p50 = por %p48, %p49
      %s52 = sadd.s32 %s51, 1
      %p55 = scmp.eq.s32.totalorder %s17, 1
      %p56 = scmp.ne.s32.totalorder %s51, %s53
      %p57 = scmp.eq.s32.totalorder %s17, 0
      %p58 = por %p56, %p57
      %p59 = scmp.ne.s32.totalorder %s51, %s53
      %p60 = scmp.eq.s32.totalorder %s22, 1
      %p61 = por %p59, %p60
      %p62 = scmp.ne.s32.totalorder %s53, %s54
      %p63 = scmp.eq.s32.totalorder %s22, 0
      %p64 = por %p62, %p63
      %p65 = scmp.ne.s32.totalorder %s53, %s54
      %p66 = scmp.eq.s32.totalorder %s23, 1
      %p67 = por %p65, %p66
      %p69 = scmp.ne.s32.totalorder %s54, %s68
      %p70 = scmp.eq.s32.totalorder %s23, 0
      %p71 = por %p69, %p70
      %s73 = sadd.s32 %s72, 1
      %p76 = scmp.eq.s32.totalorder %s17, 1
      %p77 = scmp.ne.s32.totalorder %s72, %s74
      %p78 = scmp.eq.s32.totalorder %s17, 0
      %p79 = por %p77, %p78
      %p80 = scmp.ne.s32.totalorder %s72, %s74
      %p81 = scmp.eq.s32.totalorder %s22, 1
      %p82 = por %p80, %p81
      %p83 = scmp.ne.s32.totalorder %s74, %s75
      %p84 = scmp.eq.s32.totalorder %s22, 0
      %p85 = por %p83, %p84
      %p86 = scmp.ne.s32.totalorder %s74, %s75
      %p87 = scmp.eq.s32.totalorder %s23, 1
      %p88 = por %p86, %p87
      %p90 = scmp.ne.s32.totalorder %s75, %s89
      %p91 = scmp.eq.s32.totalorder %s23, 0
      %p92 = por %p90, %p91
      %s94 = sadd.s32 %s93, 1
      %p97 = scmp.eq.s32.totalorder %s17, 1
      %p98 = scmp.ne.s32.totalorder %s93, %s95
      %p99 = scmp.eq.s32.totalorder %s17, 0
      %p100 = por %p98, %p99
      %p101 = scmp.ne.s32.totalorder %s93, %s95
      %p102 = scmp.eq.s32.totalorder %s22, 1
      %p103 = por %p101, %p102
      %p104 = scmp.ne.s32.totalorder %s95, %s96
      %p105 = scmp.eq.s32.totalorder %s22, 0
      %p106 = por %p104, %p105
      %p107 = scmp.ne.s32.totalorder %s95, %s96
      %p108 = scmp.eq.s32.totalorder %s23, 1
      %p109 = por %p107, %p108
      %p111 = scmp.ne.s32.totalorder %s96, %s110
      %p112 = scmp.eq.s32.totalorder %s23, 0
      %p113 = por %p111, %p112
      %s115 = sadd.s32 %s114, 1
      %p118 = scmp.eq.s32.totalorder %s17, 1
      %p119 = scmp.ne.s32.totalorder %s114, %s116
      %p120 = scmp.eq.s32.totalorder %s17, 0
      %p121 = por %p119, %p120
      %p122 = scmp.ne.s32.totalorder %s114, %s116
      %p123 = scmp.eq.s32.totalorder %s22, 1
      %p124 = por %p122, %p123
      %p125 = scmp.ne.s32.totalorder %s116, %s117
      %p126 = scmp.eq.s32.totalorder %s22, 0
      %p127 = por %p125, %p126
      %p128 = scmp.ne.s32.totalorder %s116, %s117
      %p129 = scmp.eq.s32.totalorder %s23, 1
      %p130 = por %p128, %p129
      %p132 = scmp.ne.s32.totalorder %s117, %s131
      %p133 = scmp.eq.s32.totalorder %s23, 0
      %p134 = por %p132, %p133
      %s135 = ssub.s32 %s17, %s24
      %p136 = scmp.eq.s32.totalorder %s135, 0
      %s138 = sadd.s32 %s137, 1
      %s139 = scalar_select %p136, %s137, %s138
      %p142 = pneg %p136
      %p143 = scmp.eq.s32.totalorder %s17, 1
      %p144 = por %p142, %p143
      %p145 = scmp.ne.s32.totalorder %s137, %s140
      %p146 = scmp.eq.s32.totalorder %s17, 0
      %p147 = por %p145, %p146
      %p148 = scmp.ne.s32.totalorder %s137, %s140
      %p149 = scmp.eq.s32.totalorder %s22, 1
      %p150 = por %p148, %p149
      %p151 = scmp.ne.s32.totalorder %s140, %s141
      %p152 = scmp.eq.s32.totalorder %s22, 0
      %p153 = por %p151, %p152
      %p154 = scmp.ne.s32.totalorder %s140, %s141
      %p155 = scmp.eq.s32.totalorder %s23, 1
      %p156 = por %p154, %p155
      %p158 = scmp.ne.s32.totalorder %s141, %s157
      %p159 = scmp.eq.s32.totalorder %s23, 0
      %p160 = por %p158, %p159
      %p161 = scmp.le.s32.totalorder 1, %s17
      %p162 = scmp.lt.s32.totalorder %s17, 3
      %p163 = pnand %p161, %p162
      %p164 = pneg %p163
      // Predicated region
      $region9: #{tpu_custom_call.1} parent=5 // pred_check
        _
      $region10: #{tpu_custom_call.1} parent=5 // pred_check_branch
        %166 = sbr.rel (%p163) target = $region12
      $region11: #{tpu_custom_call.1} parent=5 // pred_region
        %s167 = ssub.s32 %s17, 1
        // Predicated region
        $region13: #{tpu_custom_call.1} parent=11 // pred_check
          %p168 = pneg %p64
        $region14: #{tpu_custom_call.1} parent=11 // pred_check_branch
          %170 = sbr.rel (%p168) target = $region16
        $region15: #{tpu_custom_call.1} parent=11 // pred_region
          _
        $region16: #{tpu_custom_call.1} parent=11 // pred_fallthru
          _
        // Predicated region
        $region17: #{tpu_custom_call.1} parent=11 // pred_check
          %p171 = pneg %p85
        $region18: #{tpu_custom_call.1} parent=11 // pred_check_branch
          %173 = sbr.rel (%p171) target = $region20
        $region19: #{tpu_custom_call.1} parent=11 // pred_region
          _
        $region20: #{tpu_custom_call.1} parent=11 // pred_fallthru
          _
        // Predicated region
        $region21: #{tpu_custom_call.1} parent=11 // pred_check
          %p174 = pneg %p106
        $region22: #{tpu_custom_call.1} parent=11 // pred_check_branch
          %176 = sbr.rel (%p174) target = $region24
        $region23: #{tpu_custom_call.1} parent=11 // pred_region
          _
        $region24: #{tpu_custom_call.1} parent=11 // pred_fallthru
          _
        // Predicated region
        $region25: #{tpu_custom_call.1} parent=11 // pred_check
          %p177 = pneg %p127
        $region26: #{tpu_custom_call.1} parent=11 // pred_check_branch
          %179 = sbr.rel (%p177) target = $region28
        $region27: #{tpu_custom_call.1} parent=11 // pred_region
          _
        $region28: #{tpu_custom_call.1} parent=11 // pred_fallthru
          _
      $region12: #{tpu_custom_call.1} parent=5 // pred_fallthru
        _
      %p180 = scmp.lt.s32.totalorder %s17, 2
      // Predicated region
      $region29: #{tpu_custom_call.1} parent=5 // pred_check
        %p181 = pneg %p180
      $region30: #{tpu_custom_call.1} parent=5 // pred_check_branch
        %183 = sbr.rel (%p181) target = $region32
      $region31: #{tpu_custom_call.1} parent=5 // pred_region
        // Predicated region
        $region33: #{tpu_custom_call.1} parent=31 // pred_check
          %p184 = pneg %p37
        $region34: #{tpu_custom_call.1} parent=31 // pred_check_branch
          %186 = sbr.rel (%p184) target = $region36
        $region35: #{tpu_custom_call.1} parent=31 // pred_region
          %s187 = sand.u32 %s27, 1
          %s188 = scalar_lea.sflag [#allocation3], %s187
          %s189 = sand.u32 %s27, 1
          %s190 = smul.addr %s189, 16
          %s191 = scalar_lea.vmem [#allocation2], %s190
          %s193 = ssub.s32 256, 256
          %194 = vsyncadd %s188, %s193
          %s195 = smul.addr %s17, 4
          %s196 = smul.addr %s195, 64
          %s197 = scalar_lea.hbm %s0, %s196
          %s199 = sshll.u32 %s191, 4
          %s200 = int_to_ptr.vmem [resolvable:$true] %s199
          %202 = dma.hbm_to_vmem [thread:$0]  %s197, 256, %s200, %s188
        $region36: #{tpu_custom_call.1} parent=31 // pred_fallthru
          _
      $region32: #{tpu_custom_call.1} parent=5 // pred_fallthru
        _
      %p203 = scmp.le.s32.totalorder 1, %s17
      %p204 = scmp.lt.s32.totalorder %s17, 3
      %p205 = pnand %p203, %p204
      %p206 = pneg %p205
      // Predicated region
      $region37: #{tpu_custom_call.1} parent=5 // pred_check
        _
      $region38: #{tpu_custom_call.1} parent=5 // pred_check_branch
        %208 = sbr.rel (%p205) target = $region40
      $region39: #{tpu_custom_call.1} parent=5 // pred_region
        %s209 = ssub.s32 %s17, 1
        %s210 = sand.u32 %s30, 1
        %s211 = scalar_lea.sflag [#allocation3], %s210
        %s212 = sand.u32 %s30, 1
        %s213 = smul.addr %s212, 16
        %s214 = scalar_lea.vmem [#allocation2], %s213
        // Predicated region
        $region41: #{tpu_custom_call.1} parent=39 // pred_check
          %p215 = pneg %p43
        $region42: #{tpu_custom_call.1} parent=39 // pred_check_branch
          %217 = sbr.rel (%p215) target = $region44
        $region43: #{tpu_custom_call.1} parent=39 // pred_region
          %218 = dma.done %s211, 256
        $region44: #{tpu_custom_call.1} parent=39 // pred_fallthru
          _
        %s219 = sand.u32 %s30, 1
        %s220 = scalar_lea.sflag [#allocation3], %s219
        %s221 = sand.u32 %s30, 1
        %s222 = smul.addr %s221, 16
        %s223 = scalar_lea.vmem [#allocation2], %s222
        %p224 = pneg %p43
        %p225 = pneg %p40
        %p226 = pneg %p64
        %p227 = pneg %p61
        %p228 = pneg %p85
        %p229 = pneg %p82
        %p230 = pneg %p106
        %p231 = pneg %p103
        %p232 = pneg %p127
        %p233 = pneg %p124
        %p234 = pneg %p153
        %p235 = pneg %p150
        %s236 = sand.u32 %s140, 1
        %s237 = scalar_lea.sflag [#allocation4], %s236
        %s238 = sand.u32 %s140, 1
        %s239 = smul.addr %s238, 16
        %s240 = scalar_lea.vmem [#allocation5], %s239
        %v241 = vld [vmem:[%s214] sm:$0xff]
        %v242 = vld [vmem:[%s214 + $0x8] sm:$0xff]
        %v245 = vcombine.high %v241, %v241
        %v246 = vcombine.high %v242, %v242
        %vm249 = vcmask 1043456
        %v250 = vsel %vm249, %v241, 0.0
        %v251 = vsel %vm249, %v245, 0.0
        %v252 = vadd.f32 %v250, %v251
        %v253 = vsel %vm249, %v242, 0.0
        %v254 = vadd.f32 %v252, %v253
        %v255 = vsel %vm249, %v246, 0.0
        %v256 = vadd.f32 %v254, %v255
        %257 = vadd.xlane.f32.xlu0 %v256
        %v258 = vpop.xlane.xlu0 %257
        %v259 = vmul.f32 %v258, 0.001953125
        %v260 = vld [vmem:[%s1] sm:$0x3]
        %v261 = vld [vmem:[%s2] sm:$0x3]
        %vm262 = vcmask 31744
        %v264 = vsel %vm262, %v260, 0
        %v267 = vsel %vm249, %v259, 0
        %269 = vmatprep.subr.mxu0 0.0
        %270 = vmatpush1.msra.mxu0 %v267
        %271 = vmatprep.subr.mxu0 0.0
        %272 = vmatpush1.msra.mxu0 0.0
        %273 = vmatprep.subr.mxu0 0.0
        %274 = vmatpush1.msra.mxu0 0.0
        %275 = vmatprep.subr.mxu0 0.0
        %276 = vmatpush1.msra.mxu0 0.0
        %277 = vmatprep.subr.mxu0 0.0
        %278 = vmatpush1.msra.mxu0 0.0
        %279 = vmatprep.subr.mxu0 0.0
        %280 = vmatpush1.msra.mxu0 0.0
        %281 = vmatprep.subr.mxu0 0.0
        %282 = vmatpush1.msra.mxu0 0.0
        %283 = vmatprep.subr.mxu0 0.0
        %284 = vmatpush1.msra.mxu0 0.0
        %285 = vmatprep.subr.mxu0 0.0
        %286 = vmatpush1.msra.mxu0 0.0
        %287 = vmatprep.subr.mxu0 0.0
        %288 = vmatpush1.msra.mxu0 0.0
        %289 = vmatprep.subr.mxu0 0.0
        %290 = vmatpush1.msra.mxu0 0.0
        %291 = vmatprep.subr.mxu0 0.0
        %292 = vmatpush1.msra.mxu0 0.0
        %293 = vmatprep.subr.mxu0 0.0
        %294 = vmatpush1.msra.mxu0 0.0
        %295 = vmatprep.subr.mxu0 0.0
        %296 = vmatpush1.msra.mxu0 0.0
        %297 = vmatprep.subr.mxu0 0.0
        %298 = vmatpush1.msra.mxu0 0.0
        %299 = vmatprep.subr.mxu0 0.0
        %300 = vmatpush1.msra.mxu0 0.0
        %301 = vmatprep.subr.mxu0 0.0
        %302 = vmatpush1.msra.mxu0 0.0
        %303 = vmatprep.subr.mxu0 0.0
        %304 = vmatpush1.msra.mxu0 0.0
        %305 = vmatprep.subr.mxu0 0.0
        %306 = vmatpush1.msra.mxu0 0.0
        %307 = vmatprep.subr.mxu0 0.0
        %308 = vmatpush1.msra.mxu0 0.0
        %309 = vmatprep.subr.mxu0 0.0
        %310 = vmatpush1.msra.mxu0 0.0
        %311 = vmatprep.subr.mxu0 0.0
        %312 = vmatpush1.msra.mxu0 0.0
        %313 = vmatprep.subr.mxu0 0.0
        %314 = vmatpush1.msra.mxu0 0.0
        %315 = vmatprep.subr.mxu0 0.0
        %316 = vmatpush1.msra.mxu0 0.0
        %317 = vmatprep.subr.mxu0 0.0
        %318 = vmatpush1.msra.mxu0 0.0
        %319 = vmatprep.subr.mxu0 0.0
        %320 = vmatpush1.msra.mxu0 0.0
        %321 = vmatprep.subr.mxu0 0.0
        %322 = vmatpush1.msra.mxu0 0.0
        %323 = vmatprep.subr.mxu0 0.0
        %324 = vmatpush1.msra.mxu0 0.0
        %325 = vmatprep.subr.mxu0 0.0
        %326 = vmatpush1.msra.mxu0 0.0
        %327 = vmatprep.subr.mxu0 0.0
        %328 = vmatpush1.msra.mxu0 0.0
        %329 = vmatprep.subr.mxu0 0.0
        %330 = vmatpush1.msra.mxu0 0.0
        %331 = vmatprep.subr.mxu0 0.0
        %332 = vmatpush1.msra.mxu0 0.0
        %333 = vmatprep.mubr.f32.mxu0 0.0
        %334 = vmatmul.mubr.f32.gmra.mrb[0].mxu0 %v264
        %v335 = vpop.f32.mrb[0].mxu0
        %v336 = vadd.f32 %v261, %v335
        %v337 = vpop.f32.mrb[0].mxu0
        %338 = vdwg.mxu0
        %v339 = vmax.f32 %v336, 0.0
        %v340 = vld [vmem:[%s3] sm:$0xf]
        %v341 = vld [vmem:[%s4] sm:$0xf]
        %vm342 = vcmask 15360
        %v344 = vsel %vm342, %v340, 0
        %vm346 = vcmask 1041408
        %v348 = vsel %vm346, %v339, 0
        %350 = vmatprep.subr.mxu0 0.0
        %351 = vmatpush1.msra.mxu0 %v348
        %352 = vmatprep.subr.mxu0 0.0
        %353 = vmatpush1.msra.mxu0 0.0
        %354 = vmatprep.subr.mxu0 0.0
        %355 = vmatpush1.msra.mxu0 0.0
        %356 = vmatprep.subr.mxu0 0.0
        %357 = vmatpush1.msra.mxu0 0.0
        %358 = vmatprep.subr.mxu0 0.0
        %359 = vmatpush1.msra.mxu0 0.0
        %360 = vmatprep.subr.mxu0 0.0
        %361 = vmatpush1.msra.mxu0 0.0
        %362 = vmatprep.subr.mxu0 0.0
        %363 = vmatpush1.msra.mxu0 0.0
        %364 = vmatprep.subr.mxu0 0.0
        %365 = vmatpush1.msra.mxu0 0.0
        %366 = vmatprep.subr.mxu0 0.0
        %367 = vmatpush1.msra.mxu0 0.0
        %368 = vmatprep.subr.mxu0 0.0
        %369 = vmatpush1.msra.mxu0 0.0
        %370 = vmatprep.subr.mxu0 0.0
        %371 = vmatpush1.msra.mxu0 0.0
        %372 = vmatprep.subr.mxu0 0.0
        %373 = vmatpush1.msra.mxu0 0.0
        %374 = vmatprep.subr.mxu0 0.0
        %375 = vmatpush1.msra.mxu0 0.0
        %376 = vmatprep.subr.mxu0 0.0
        %377 = vmatpush1.msra.mxu0 0.0
        %378 = vmatprep.subr.mxu0 0.0
        %379 = vmatpush1.msra.mxu0 0.0
        %380 = vmatprep.subr.mxu0 0.0
        %381 = vmatpush1.msra.mxu0 0.0
        %382 = vmatprep.subr.mxu0 0.0
        %383 = vmatpush1.msra.mxu0 0.0
        %384 = vmatprep.subr.mxu0 0.0
        %385 = vmatpush1.msra.mxu0 0.0
        %386 = vmatprep.subr.mxu0 0.0
        %387 = vmatpush1.msra.mxu0 0.0
        %388 = vmatprep.subr.mxu0 0.0
        %389 = vmatpush1.msra.mxu0 0.0
        %390 = vmatprep.subr.mxu0 0.0
        %391 = vmatpush1.msra.mxu0 0.0
        %392 = vmatprep.subr.mxu0 0.0
        %393 = vmatpush1.msra.mxu0 0.0
        %394 = vmatprep.subr.mxu0 0.0
        %395 = vmatpush1.msra.mxu0 0.0
        %396 = vmatprep.subr.mxu0 0.0
        %397 = vmatpush1.msra.mxu0 0.0
        %398 = vmatprep.subr.mxu0 0.0
        %399 = vmatpush1.msra.mxu0 0.0
        %400 = vmatprep.subr.mxu0 0.0
        %401 = vmatpush1.msra.mxu0 0.0
        %402 = vmatprep.subr.mxu0 0.0
        %403 = vmatpush1.msra.mxu0 0.0
        %404 = vmatprep.subr.mxu0 0.0
        %405 = vmatpush1.msra.mxu0 0.0
        %406 = vmatprep.subr.mxu0 0.0
        %407 = vmatpush1.msra.mxu0 0.0
        %408 = vmatprep.subr.mxu0 0.0
        %409 = vmatpush1.msra.mxu0 0.0
        %410 = vmatprep.subr.mxu0 0.0
        %411 = vmatpush1.msra.mxu0 0.0
        %412 = vmatprep.subr.mxu0 0.0
        %413 = vmatpush1.msra.mxu0 0.0
        %414 = vmatprep.mubr.f32.mxu0 0.0
        %415 = vmatmul.mubr.f32.gmra.mrb[0].mxu0 %v344
        %v416 = vpop.f32.mrb[0].mxu0
        %v417 = vadd.f32 %v341, %v416
        %v418 = vpop.f32.mrb[0].mxu0
        %419 = vdwg.mxu0
        %v420 = vxor.u32 %v417, 2147483648
        %v421 = vmul.f32 %v420, 1.442695
        %v422 = vpow.pop %v421
        %v423 = vadd.f32 %v422, 1.0
        %v424 = vrcp.pop %v423
        %v425 = vmul.f32 1.0, %v424
        %427 = vset.pattern.permute.xlu0 0
        %428 = vperm.xlu0 %427, %v425
        %v429 = vpop.permute.xlu0 %428
        %v431 = vunpack.c.l.s4 839922192
        %v432 = vunpack.c.0.s8 %v431
        %v433 = vlaneseq
        %v434 = vshrl.u32 %v433, 7
        %v435 = vsub.s32 %v432, %v434
        %v436 = vrot.slane %v429, %v435
        %v438 = vmul.f32 %v241, %v436
        %v439 = vmul.f32 %v242, %v436
        %440 = vst [vmem:[%s240] sm:$0xff] %v438
        %441 = vst [vmem:[%s240 + $0x8] sm:$0xff] %v439
        %s442 = sand.u32 %s140, 1
        %s443 = scalar_lea.sflag [#allocation4], %s442
        %s444 = sand.u32 %s140, 1
        %s445 = smul.addr %s444, 16
        %s446 = scalar_lea.vmem [#allocation5], %s445
        // Predicated region
        $region45: #{tpu_custom_call.1} parent=39 // pred_check
          %p447 = pneg %p150
        $region46: #{tpu_custom_call.1} parent=39 // pred_check_branch
          %449 = sbr.rel (%p447) target = $region48
        $region47: #{tpu_custom_call.1} parent=39 // pred_region
          %s451 = ssub.s32 256, 256
          %452 = vsyncadd %s443, %s451
          %s453 = smul.addr %s22, 4
          %s454 = smul.addr %s453, 64
          %s455 = scalar_lea.hbm %s5, %s454
          %s457 = sshll.u32 %s446, 4
          %s458 = int_to_ptr.vmem [resolvable:$true] %s457
          %460 = dma.vmem_to_hbm [thread:$0]  %s458, 256, %s455, %s443
        $region48: #{tpu_custom_call.1} parent=39 // pred_fallthru
          _
      $region40: #{tpu_custom_call.1} parent=5 // pred_fallthru
        _
      %p461 = scmp.le.s32.totalorder 2, %s17
      // Predicated region
      $region49: #{tpu_custom_call.1} parent=5 // pred_check
        %p462 = pneg %p461
      $region50: #{tpu_custom_call.1} parent=5 // pred_check_branch
        %464 = sbr.rel (%p462) target = $region52
      $region51: #{tpu_custom_call.1} parent=5 // pred_region
        %s465 = ssub.s32 %s17, 2
        // Predicated region
        $region53: #{tpu_custom_call.1} parent=51 // pred_check
          %p466 = pneg %p156
        $region54: #{tpu_custom_call.1} parent=51 // pred_check_branch
          %468 = sbr.rel (%p466) target = $region56
        $region55: #{tpu_custom_call.1} parent=51 // pred_region
          %s469 = sand.u32 %s141, 1
          %s470 = scalar_lea.sflag [#allocation4], %s469
          %s471 = sand.u32 %s141, 1
          %s472 = smul.addr %s471, 16
          %s473 = scalar_lea.vmem [#allocation5], %s472
          %474 = dma.done %s470, 256
        $region56: #{tpu_custom_call.1} parent=51 // pred_fallthru
          _
      $region52: #{tpu_custom_call.1} parent=5 // pred_fallthru
        _
    $region6: #{tpu_custom_call.1} parent=1 // loop_footer
      %s21 = sadd.s32 1, %s17
    $region7: #{tpu_custom_call.1} parent=1 // loop_footer_branch
      %16 = sbr.rel target = $region3
    $region8: #{tpu_custom_call.1} parent=1 // loop_exit
      _
    %475 = vsyncpa [#allocation3], 1
    %s476 = scalar_lea.sflag [#allocation3], 1
    %477 = vsyncpa %s476, 1
    %478 = vsyncpa [#allocation4], 1
    %s479 = scalar_lea.sflag [#allocation4], 1
    %480 = vsyncpa %s479, 1

</llo_original>
